<compile_context>
chip_gen: v6e
topology: v6e:2x2x1
jax: 0.10.0
libtpu: 0.0.40
codegen_flags: <defaults>
</compile_context>

<pallas_src>
import math

import numpy as np
import jax
import jax.numpy as jnp
from jax.experimental import pallas as pl
from jax.experimental.pallas import tpu as pltpu

RADIUS = 1.1          # radius_graph(data.pos, 1.1, data.batch)
NUM_NEIGHBORS = 2.0   # constants hard-coded in Network.forward
NUM_NODES = 4.0

# e3nn irreps as (mul, l, parity); component layout is u-major: off + u*(2l+1) + (m+l)
SH_IRREPS = ((1, 0, +1), (1, 1, -1), (1, 2, +1), (1, 3, -1))                     # dim 16
MID_IRREPS = ((64, 0, +1), (24, 1, +1), (24, 1, -1), (16, 2, +1), (16, 2, -1))   # dim 368
OUT_IRREPS = ((1, 0, -1), (6, 0, +1))                                            # dim 7

D_SH = 16
D_MID = 368
D_MID_PAD = 384       # 3 * 128 lanes -> lane-dense intermediates along the mid axis
D_OUT = 7


def irreps_dim(irreps):
    return sum(mul * (2 * l + 1) for mul, l, _ in irreps)


def _offsets(irreps):
    offs, o = [], 0
    for mul, l, _ in irreps:
        offs.append(o)
        o += mul * (2 * l + 1)
    return offs


# ----------------------------- Wigner 3j (real basis) ------------------------------
def _wigner_3j_complex(j1, j2, j3, m1, m2, m3):
    if m1 + m2 + m3 != 0 or not (abs(j1 - j2) <= j3 <= j1 + j2):
        return 0.0
    if abs(m1) > j1 or abs(m2) > j2 or abs(m3) > j3:
        return 0.0
    f = math.factorial
    t1, t2 = j2 - j3 - m1, j1 - j3 + m2
    t3, t4, t5 = j1 + j2 - j3, j1 - m1, j2 + m2
    s = 0.0
    for t in range(max(0, t1, t2), min(t3, t4, t5) + 1):
        s += (-1.0) ** t / (f(t) * f(t - t1) * f(t - t2) * f(t3 - t) * f(t4 - t) * f(t5 - t))
    tri = f(j1 + j2 - j3) * f(j1 - j2 + j3) * f(-j1 + j2 + j3) / f(j1 + j2 + j3 + 1)
    s *= (-1.0) ** (j1 - j2 - m3) * math.sqrt(
        tri * f(j1 + m1) * f(j1 - m1) * f(j2 + m2) * f(j2 - m2) * f(j3 + m3) * f(j3 - m3))
    return s


def _real_basis_U(l):
    """Unitary change of basis complex -> real spherical harmonics (rows = real m)."""
    U = np.zeros((2 * l + 1, 2 * l + 1), dtype=complex)
    U[l, l] = 1.0
    s2 = 1.0 / math.sqrt(2.0)
    for m in range(1, l + 1):
        U[l + m, l + m] = ((-1.0) ** m) * s2
        U[l + m, l - m] = s2
        U[l - m, l - m] = 1j * s2
        U[l - m, l + m] = -1j * ((-1.0) ** m) * s2
    return U


def real_wigner_3j(l1, l2, l3):
    """Rotation-invariant coupling tensor for real irreps l1 x l2 -> l3, Frobenius norm 1."""
    W = np.zeros((2 * l1 + 1, 2 * l2 + 1, 2 * l3 + 1), dtype=complex)
    for m1 in range(-l1, l1 + 1):
        for m2 in range(-l2, l2 + 1):
            m3 = -(m1 + m2)
            if abs(m3) <= l3:
                W[m1 + l1, m2 + l2, m3 + l3] = _wigner_3j_complex(l1, l2, l3, m1, m2, m3)
    C = np.einsum('am,bn,cp,mnp->abc',
                  _real_basis_U(l1), _real_basis_U(l2), _real_basis_U(l3), W)
    X = C.real if np.linalg.norm(C.real) >= np.linalg.norm(C.imag) else C.imag
    n = np.linalg.norm(X)
    return (X / n).astype(np.float32) if n > 1e-12 else X.astype(np.float32)


def build_fctp_tensor(irreps_in1, irreps_in2, irreps_out, key):
    """Fuse a FullyConnectedWeightedTensorProduct (all selection-rule-allowed paths,
    per-path weights, path normalization) into T[j, i, k]:
        out[k] = sum_{i,j} T[j, i, k] * in1[i] * in2[j]."""
    # TODO(synk): weights are synthetic N(0,1) draws (no checkpoint); path normalization
    # uses the 1/sqrt(fan_in) approximation of e3nn's.
    D1, D2, Do = irreps_dim(irreps_in1), irreps_dim(irreps_in2), irreps_dim(irreps_out)
    off1, off2, offo = _offsets(irreps_in1), _offsets(irreps_in2), _offsets(irreps_out)
    paths, fan_in = [], [0] * len(irreps_out)
    for i1, (mul1, l1, p1) in enumerate(irreps_in1):
        for i2, (mul2, l2, p2) in enumerate(irreps_in2):
            for io, (mulo, lo, po) in enumerate(irreps_out):
                if p1 * p2 == po and abs(l1 - l2) <= lo <= l1 + l2:
                    paths.append((i1, i2, io))
                    fan_in[io] += mul1 * mul2
    T = np.zeros((D2, D1, Do), np.float32)
    for (i1, i2, io) in paths:
        mul1, l1, _ = irreps_in1[i1]
        mul2, l2, _ = irreps_in2[i2]
        mulo, lo, _ = irreps_out[io]
        C = real_wigner_3j(l1, l2, lo)                      # (2l1+1, 2l2+1, 2lo+1)
        key, sub = jax.random.split(key)
        w = np.asarray(jax.random.normal(sub, (mul1, mul2, mulo)), np.float32)
        alpha = 1.0 / math.sqrt(fan_in[io])
        blk = np.einsum('abc,uvq->vbuaqc', C, w).reshape(
            mul2 * (2 * l2 + 1), mul1 * (2 * l1 + 1), mulo * (2 * lo + 1)) * alpha
        T[off2[i2]:off2[i2] + blk.shape[0],
          off1[i1]:off1[i1] + blk.shape[1],
          offo[io]:offo[io] + blk.shape[2]] += blk
    return jnp.asarray(T)


# --------------------------- spherical harmonics (l<=3) ----------------------------
def _sh_cols(x, y, z):
    """Real spherical harmonics l=0..3 of the UNNORMALIZED vector (e3nn normalize=False),
    'component' normalization (sum_m Y_lm^2 = 2l+1 on the unit sphere).  m = -l..l."""
    # TODO(synk): e3nn's real-SH basis differs by a fixed per-l orthogonal change of basis.
    r2 = x * x + y * y + z * z
    s3, s5, s7 = math.sqrt(3.0), math.sqrt(5.0), math.sqrt(7.0)
    s15, s105 = math.sqrt(15.0), math.sqrt(105.0)
    s35_8, s21_8 = math.sqrt(35.0 / 8.0), math.sqrt(21.0 / 8.0)
    return [
        jnp.ones_like(x),                                          # l=0
        s3 * y, s3 * z, s3 * x,                                    # l=1
        s15 * x * y, s15 * y * z, 0.5 * s5 * (3.0 * z * z - r2),
        s15 * x * z, 0.5 * s15 * (x * x - y * y),                  # l=2
        s35_8 * y * (3.0 * x * x - y * y), s105 * x * y * z,
        s21_8 * y * (5.0 * z * z - r2), 0.5 * s7 * z * (5.0 * z * z - 3.0 * r2),
        s21_8 * x * (5.0 * z * z - r2), 0.5 * s105 * z * (x * x - y * y),
        s35_8 * x * (x * x - 3.0 * y * y),                         # l=3
    ]


# --------------------------------- Pallas kernel -----------------------------------
def tetris_polynomial_kernel(sh_ref, shrep_ref, sh7_ref, scat_ref, poolscat_ref,
                             ttile_ref, t1_ref, t2_ref, gsum_ref, out_ref):
    n = scat_ref.shape[0]          # nodes
    f32 = jnp.float32

    scat = scat_ref[...]           # (N, P) masked scatter over edge_dst, 1/sqrt(2) folded in

    # node_features = scatter(edge_sh, edge_dst) / sqrt(num_neighbors)
    nf1 = jnp.dot(scat, sh_ref[...], preferred_element_type=f32)                # (N, 16)

    # tp1, reassociated as (scat @ z) @ t1 with z[p, j*16+i] = sh[p, j] * nf1[p % N, i].
    # Lane replication nf1 -> (N, 256) goes through the (otherwise idle) MXU.
    nf1_rep = jnp.dot(nf1, ttile_ref[...], preferred_element_type=f32)          # (N, 256)
    z = jnp.concatenate([nf1_rep] * n, axis=0) * shrep_ref[...]                 # (P, 256)
    zs = jnp.dot(scat, z, preferred_element_type=f32)                           # (N, 256)
    nf2 = jnp.dot(zs, t1_ref[...], preferred_element_type=f32)                  # (N, 384)

    # tp2: contract the (zero-padded) 384 axis at N rows, then sh-weight at P rows,
    # pool with the precomputed pool@scat, and group-sum over j.  Column layout k*16+j.
    y = jnp.dot(nf2, t2_ref[...], preferred_element_type=f32)                   # (N, 112)
    yw = jnp.concatenate([y] * n, axis=0) * sh7_ref[...]                        # (P, 112)
    pooled = jnp.dot(poolscat_ref[...], yw, preferred_element_type=f32)         # (G, 112)
    out_ref[...] = jnp.dot(pooled, gsum_ref[...], preferred_element_type=f32)   # (G, 7)


# ------------------------------------ glue -----------------------------------------
def _graph_matrices(pos, batch, num_graphs):
    """radius_graph + scatter/gather/pool structure as dense masked 0/1 matrices."""
    n = pos.shape[0]
    p = n * n
    diff = pos[None, :, :] - pos[:, None, :]             # diff[dst, src] = pos[src] - pos[dst]
    dist2 = jnp.sum(diff * diff, axis=-1)
    adj = ((batch[:, None] == batch[None, :])
           & (~jnp.eye(n, dtype=bool))
           & (dist2 <= RADIUS * RADIUS)).astype(jnp.float32)
    scat = (jnp.eye(n, dtype=jnp.float32)[:, :, None] * adj[:, None, :]).reshape(n, p)
    gath = jnp.tile(jnp.eye(n, dtype=jnp.float32), (n, 1))    # used by the reference only
    pool = (batch[None, :] == jnp.arange(num_graphs)[:, None]).astype(jnp.float32)
    relx = diff[..., 0].reshape(p, 1)
    rely = diff[..., 1].reshape(p, 1)
    relz = diff[..., 2].reshape(p, 1)
    return relx, rely, relz, scat, gath, pool


def prepare_weights(t1, t2):
    """One-time weight/constant preparation (hoisted out of the per-call wrapper).
    t1: (16, 16, 368) as (j, i, k); t2: (16, 368, 7) as (j, i, k)."""
    t1_np = np.asarray(t1, np.float32)
    t2_np = np.asarray(t2, np.float32)
    # tp1 tensor as (j*16 + i, k), mid axis zero-padded 368 -> 384 (lane-dense)
    t1_r = np.zeros((D_SH * D_SH, D_MID_PAD), np.float32)
    t1_r[:, :D_MID] = t1_np.reshape(D_SH * D_SH, D_MID)
    # tp2 tensor as (i, k*16 + j), mid axis zero-padded 368 -> 384 (exact: pads hit zeros)
    t2_r = np.zeros((D_MID_PAD, D_OUT * D_SH), np.float32)
    t2_r[:D_MID, :] = np.transpose(t2_np, (1, 2, 0)).reshape(D_MID, D_OUT * D_SH)
    # lane-replication matrix: (nf @ ttile)[n, c] = nf[n, c % 16]
    ttile = (np.arange(D_SH * D_SH)[None, :] % D_SH
             == np.arange(D_SH)[:, None]).astype(np.float32)          # (16, 256)
    # group-sum over j: column c = k*16 + j  ->  output k = c // 16
    gsum = (np.arange(D_OUT * D_SH)[:, None] // D_SH
            == np.arange(D_OUT)[None, :]).astype(np.float32)          # (112, 7)
    return (jnp.asarray(t1_r), jnp.asarray(t2_r), jnp.asarray(ttile), jnp.asarray(gsum))


def network_forward(pos, batch, weights, num_graphs):
    """Pallas implementation of Network.forward(data) with data = (pos, batch)."""
    t1_r, t2_r, ttile, gsum = weights
    n = pos.shape[0]
    p = n * n
    relx, rely, relz, scat, _gath, pool = _graph_matrices(pos, batch, num_graphs)
    # lane-dense edge spherical harmonics + replicated variants (pure layout prep)
    sh = jnp.concatenate(_sh_cols(relx, rely, relz), axis=-1)                    # (P, 16)
    sh_rep = jnp.repeat(sh, D_SH, axis=1)                                        # (P, 256), col j*16+i -> sh_j
    sh7 = jnp.tile(sh, (1, D_OUT))                                               # (P, 112), col k*16+j -> sh_j
    # fold normalization constants into the structure matrices
    inv_nbr = 1.0 / math.sqrt(NUM_NEIGHBORS)
    scat_s = scat * inv_nbr                                                      # (N, P)
    pool_scat = jnp.matmul(pool, scat) * (inv_nbr / math.sqrt(NUM_NODES))        # (G, P)

    full = lambda shape: pl.BlockSpec(shape, lambda i: (0, 0))
    # NOTE: with many (pos, batch) instances, sh/sh_rep/sh7/scat_s/pool_scat would get a
    # leading batch axis iterated as a "parallel" grid axis (weights stay VMEM-resident,
    # both v7x TensorCores engaged); with a single instance grid=(1,) is the whole problem.
    return pl.pallas_call(
        tetris_polynomial_kernel,
        out_shape=jax.ShapeDtypeStruct((num_graphs, D_OUT), jnp.float32),
        grid=(1,),
        in_specs=[full((p, D_SH)), full((p, D_SH * D_SH)), full((p, D_OUT * D_SH)),
                  full((n, p)), full((num_graphs, p)),
                  full((D_SH, D_SH * D_SH)), full((D_SH * D_SH, D_MID_PAD)),
                  full((D_MID_PAD, D_OUT * D_SH)), full((D_OUT * D_SH, D_OUT))],
        out_specs=full((num_graphs, D_OUT)),
        compiler_params=pltpu.CompilerParams(dimension_semantics=("arbitrary",)),
    )(sh, sh_rep, sh7, scat_s, pool_scat, ttile, t1_r, t2_r, gsum)


def reference_forward(pos, batch, t1, t2, num_graphs):
    """Pure-JAX reference of the same computation (for a correctness check)."""
    relx, rely, relz, scat, gath, pool = _graph_matrices(pos, batch, num_graphs)
    hi = jax.lax.Precision.HIGHEST
    sh = jnp.concatenate(_sh_cols(relx, rely, relz), axis=-1)
    inv_nbr = 1.0 / math.sqrt(NUM_NEIGHBORS)
    nf = jnp.matmul(scat, sh, precision=hi) * inv_nbr
    e1 = jnp.einsum('pj,pi,jik->pk', sh, jnp.matmul(gath, nf, precision=hi), t1, precision=hi)
    nf = jnp.matmul(scat, e1, precision=hi) * inv_nbr
    e2 = jnp.einsum('pj,pi,jik->pk', sh, jnp.matmul(gath, nf, precision=hi), t2, precision=hi)
    nf = jnp.matmul(scat, e2, precision=hi) * inv_nbr
    return jnp.matmul(pool, nf, precision=hi) * (1.0 / math.sqrt(NUM_NODES))


if __name__ == "__main__":
    key = jax.random.PRNGKey(0)
    k_pos, k_w1, k_w2 = jax.random.split(key, 3)

    # two small tetris-like graphs (4 nodes each), unit spacing + tiny jitter
    base = jnp.array(
        [[0., 0., 0.], [0., 0., 1.], [1., 0., 0.], [1., 0., 1.],    # graph 0: square
         [0., 0., 0.], [0., 0., 1.], [0., 0., 2.], [0., 0., 3.]],   # graph 1: line
        dtype=jnp.float32)
    pos = base + 0.01 * jax.random.normal(k_pos, base.shape, jnp.float32)
    batch = jnp.array([0, 0, 0, 0, 1, 1, 1, 1], dtype=jnp.int32)
    num_graphs = 2

    t1 = build_fctp_tensor(SH_IRREPS, SH_IRREPS, MID_IRREPS, k_w1)   # (16, 16, 368)
    t2 = build_fctp_tensor(MID_IRREPS, SH_IRREPS, OUT_IRREPS, k_w2)  # (16, 368, 7)

    weights = prepare_weights(t1, t2)                                # hoisted, runs once
    fwd = jax.jit(network_forward, static_argnums=(3,))

    out = jax.block_until_ready(fwd(pos, batch, weights, num_graphs))
    assert out.shape == (num_graphs, irreps_dim(OUT_IRREPS)) and out.dtype == jnp.float32

    ref = jax.block_until_ready(reference_forward(pos, batch, t1, t2, num_graphs))
    np.testing.assert_allclose(np.asarray(out), np.asarray(ref), rtol=2e-2, atol=2e-2)
    print("KERNEL_OK")
</pallas_src>

<mosaic_0001>
module attributes {stable_mosaic.version = 11 : i64} {
  func.func @tetris_polynomial_kernel(%arg0: i32, %arg1: memref<64x16xf32, #tpu.memory_space<vmem>>, %arg2: memref<64x256xf32, #tpu.memory_space<vmem>>, %arg3: memref<64x112xf32, #tpu.memory_space<vmem>>, %arg4: memref<8x64xf32, #tpu.memory_space<vmem>>, %arg5: memref<2x64xf32, #tpu.memory_space<vmem>>, %arg6: memref<16x256xf32, #tpu.memory_space<vmem>>, %arg7: memref<256x384xf32, #tpu.memory_space<vmem>>, %arg8: memref<384x112xf32, #tpu.memory_space<vmem>>, %arg9: memref<112x7xf32, #tpu.memory_space<vmem>>, %arg10: memref<2x7xf32, #tpu.memory_space<vmem>>) attributes {dimension_semantics = [#tpu.dimension_semantics<arbitrary>], iteration_bounds = array<i64: 1>, scalar_prefetch = 0 : i64, scratch_operands = 0 : i64, tpu.core_type = #tpu.core_type<tc>, window_params = [{pipeline_mode = #tpu.pipeline_mode<synchronous>, transform_indices = @transform_0, window_bounds = array<i64: 64, 16>}, {pipeline_mode = #tpu.pipeline_mode<synchronous>, transform_indices = @transform_1, window_bounds = array<i64: 64, 256>}, {pipeline_mode = #tpu.pipeline_mode<synchronous>, transform_indices = @transform_2, window_bounds = array<i64: 64, 112>}, {pipeline_mode = #tpu.pipeline_mode<synchronous>, transform_indices = @transform_3, window_bounds = array<i64: 8, 64>}, {pipeline_mode = #tpu.pipeline_mode<synchronous>, transform_indices = @transform_4, window_bounds = array<i64: 2, 64>}, {pipeline_mode = #tpu.pipeline_mode<synchronous>, transform_indices = @transform_5, window_bounds = array<i64: 16, 256>}, {pipeline_mode = #tpu.pipeline_mode<synchronous>, transform_indices = @transform_6, window_bounds = array<i64: 256, 384>}, {pipeline_mode = #tpu.pipeline_mode<synchronous>, transform_indices = @transform_7, window_bounds = array<i64: 384, 112>}, {pipeline_mode = #tpu.pipeline_mode<synchronous>, transform_indices = @transform_8, window_bounds = array<i64: 112, 7>}, {pipeline_mode = #tpu.pipeline_mode<synchronous>, transform_indices = @transform_9, window_bounds = array<i64: 2, 7>}]} {
    %c0 = arith.constant 0 : index
    %c0_0 = arith.constant 0 : index
    %0 = vector.load %arg4[%c0, %c0_0] : memref<8x64xf32, #tpu.memory_space<vmem>>, vector<8x64xf32>
    %c0_1 = arith.constant 0 : index
    %c0_2 = arith.constant 0 : index
    %1 = vector.load %arg1[%c0_1, %c0_2] : memref<64x16xf32, #tpu.memory_space<vmem>>, vector<64x16xf32>
    %cst = arith.constant dense<0.000000e+00> : vector<8x16xf32>
    %2 = tpu.matmul %0, %1, %cst {dimension_numbers = #tpu.dot_dimension_numbers<[1], [0], [0], [1], [0, 0, 1, 1], [], []>} : vector<8x64xf32>, vector<64x16xf32>, vector<8x16xf32> -> vector<8x16xf32>
    %c0_3 = arith.constant 0 : index
    %c0_4 = arith.constant 0 : index
    %3 = vector.load %arg6[%c0_3, %c0_4] : memref<16x256xf32, #tpu.memory_space<vmem>>, vector<16x256xf32>
    %cst_5 = arith.constant dense<0.000000e+00> : vector<8x256xf32>
    %4 = tpu.matmul %2, %3, %cst_5 {dimension_numbers = #tpu.dot_dimension_numbers<[1], [0], [0], [1], [0, 0, 1, 1], [], []>} : vector<8x16xf32>, vector<16x256xf32>, vector<8x256xf32> -> vector<8x256xf32>
    %5 = tpu.concatenate %4, %4, %4, %4, %4, %4, %4, %4 in 0 : vector<8x256xf32>, vector<8x256xf32>, vector<8x256xf32>, vector<8x256xf32>, vector<8x256xf32>, vector<8x256xf32>, vector<8x256xf32>, vector<8x256xf32> -> vector<64x256xf32>
    %c0_6 = arith.constant 0 : index
    %c0_7 = arith.constant 0 : index
    %6 = vector.load %arg2[%c0_6, %c0_7] : memref<64x256xf32, #tpu.memory_space<vmem>>, vector<64x256xf32>
    %7 = arith.mulf %5, %6 : vector<64x256xf32>
    %cst_8 = arith.constant dense<0.000000e+00> : vector<8x256xf32>
    %8 = tpu.matmul %0, %7, %cst_8 {dimension_numbers = #tpu.dot_dimension_numbers<[1], [0], [0], [1], [0, 0, 1, 1], [], []>} : vector<8x64xf32>, vector<64x256xf32>, vector<8x256xf32> -> vector<8x256xf32>
    %c0_9 = arith.constant 0 : index
    %c0_10 = arith.constant 0 : index
    %9 = vector.load %arg7[%c0_9, %c0_10] : memref<256x384xf32, #tpu.memory_space<vmem>>, vector<256x384xf32>
    %cst_11 = arith.constant dense<0.000000e+00> : vector<8x384xf32>
    %10 = tpu.matmul %8, %9, %cst_11 {dimension_numbers = #tpu.dot_dimension_numbers<[1], [0], [0], [1], [0, 0, 1, 1], [], []>} : vector<8x256xf32>, vector<256x384xf32>, vector<8x384xf32> -> vector<8x384xf32>
    %c0_12 = arith.constant 0 : index
    %c0_13 = arith.constant 0 : index
    %11 = vector.load %arg8[%c0_12, %c0_13] : memref<384x112xf32, #tpu.memory_space<vmem>>, vector<384x112xf32>
    %cst_14 = arith.constant dense<0.000000e+00> : vector<8x112xf32>
    %12 = tpu.matmul %10, %11, %cst_14 {dimension_numbers = #tpu.dot_dimension_numbers<[1], [0], [0], [1], [0, 0, 1, 1], [], []>} : vector<8x384xf32>, vector<384x112xf32>, vector<8x112xf32> -> vector<8x112xf32>
    %13 = tpu.concatenate %12, %12, %12, %12, %12, %12, %12, %12 in 0 : vector<8x112xf32>, vector<8x112xf32>, vector<8x112xf32>, vector<8x112xf32>, vector<8x112xf32>, vector<8x112xf32>, vector<8x112xf32>, vector<8x112xf32> -> vector<64x112xf32>
    %c0_15 = arith.constant 0 : index
    %c0_16 = arith.constant 0 : index
    %14 = vector.load %arg3[%c0_15, %c0_16] : memref<64x112xf32, #tpu.memory_space<vmem>>, vector<64x112xf32>
    %15 = arith.mulf %13, %14 : vector<64x112xf32>
    %c0_17 = arith.constant 0 : index
    %c0_18 = arith.constant 0 : index
    %16 = vector.load %arg5[%c0_17, %c0_18] : memref<2x64xf32, #tpu.memory_space<vmem>>, vector<2x64xf32>
    %cst_19 = arith.constant dense<0.000000e+00> : vector<2x112xf32>
    %17 = tpu.matmul %16, %15, %cst_19 {dimension_numbers = #tpu.dot_dimension_numbers<[1], [0], [0], [1], [0, 0, 1, 1], [], []>} : vector<2x64xf32>, vector<64x112xf32>, vector<2x112xf32> -> vector<2x112xf32>
    %c0_20 = arith.constant 0 : index
    %c0_21 = arith.constant 0 : index
    %18 = vector.load %arg9[%c0_20, %c0_21] : memref<112x7xf32, #tpu.memory_space<vmem>>, vector<112x7xf32>
    %cst_22 = arith.constant dense<0.000000e+00> : vector<2x7xf32>
    %19 = tpu.matmul %17, %18, %cst_22 {dimension_numbers = #tpu.dot_dimension_numbers<[1], [0], [0], [1], [0, 0, 1, 1], [], []>} : vector<2x112xf32>, vector<112x7xf32>, vector<2x7xf32> -> vector<2x7xf32>
    %c0_23 = arith.constant 0 : index
    %c0_24 = arith.constant 0 : index
    %20 = vector.load %arg10[%c0_23, %c0_24] : memref<2x7xf32, #tpu.memory_space<vmem>>, vector<2x7xf32>
    tpu.vector_store %arg10[%c0_23, %c0_24], %19 {strides = array<i32>} : memref<2x7xf32, #tpu.memory_space<vmem>>, vector<2x7xf32>,
    return
  }
  func.func @transform_0(%arg0: i32) -> (i32, i32) {
    %c0_i32 = arith.constant 0 : i32
    %c0_i32_0 = arith.constant 0 : i32
    %c0_i32_1 = arith.constant 0 : i32
    return %c0_i32, %c0_i32_0 : i32, i32
  }
  func.func @transform_1(%arg0: i32) -> (i32, i32) {
    %c0_i32 = arith.constant 0 : i32
    %c0_i32_0 = arith.constant 0 : i32
    %c0_i32_1 = arith.constant 0 : i32
    return %c0_i32, %c0_i32_0 : i32, i32
  }
  func.func @transform_2(%arg0: i32) -> (i32, i32) {
    %c0_i32 = arith.constant 0 : i32
    %c0_i32_0 = arith.constant 0 : i32
    %c0_i32_1 = arith.constant 0 : i32
    return %c0_i32, %c0_i32_0 : i32, i32
  }
  func.func @transform_3(%arg0: i32) -> (i32, i32) {
    %c0_i32 = arith.constant 0 : i32
    %c0_i32_0 = arith.constant 0 : i32
    %c0_i32_1 = arith.constant 0 : i32
    return %c0_i32, %c0_i32_0 : i32, i32
  }
  func.func @transform_4(%arg0: i32) -> (i32, i32) {
    %c0_i32 = arith.constant 0 : i32
    %c0_i32_0 = arith.constant 0 : i32
    %c0_i32_1 = arith.constant 0 : i32
    return %c0_i32, %c0_i32_0 : i32, i32
  }
  func.func @transform_5(%arg0: i32) -> (i32, i32) {
    %c0_i32 = arith.constant 0 : i32
    %c0_i32_0 = arith.constant 0 : i32
    %c0_i32_1 = arith.constant 0 : i32
    return %c0_i32, %c0_i32_0 : i32, i32
  }
  func.func @transform_6(%arg0: i32) -> (i32, i32) {
    %c0_i32 = arith.constant 0 : i32
    %c0_i32_0 = arith.constant 0 : i32
    %c0_i32_1 = arith.constant 0 : i32
    return %c0_i32, %c0_i32_0 : i32, i32
  }
  func.func @transform_7(%arg0: i32) -> (i32, i32) {
    %c0_i32 = arith.constant 0 : i32
    %c0_i32_0 = arith.constant 0 : i32
    %c0_i32_1 = arith.constant 0 : i32
    return %c0_i32, %c0_i32_0 : i32, i32
  }
  func.func @transform_8(%arg0: i32) -> (i32, i32) {
    %c0_i32 = arith.constant 0 : i32
    %c0_i32_0 = arith.constant 0 : i32
    %c0_i32_1 = arith.constant 0 : i32
    return %c0_i32, %c0_i32_0 : i32, i32
  }
  func.func @transform_9(%arg0: i32) -> (i32, i32) {
    %c0_i32 = arith.constant 0 : i32
    %c0_i32_0 = arith.constant 0 : i32
    %c0_i32_1 = arith.constant 0 : i32
    return %c0_i32, %c0_i32_0 : i32, i32
  }
}

</mosaic_0001>

<llo_original>
// kernel: network_forward.1
$region0: #{network_forward.1}
  #allocation0 [shape = 'u32[]', space=smem, size = 0x4, offset = 0x4, fixed_abs, tag = 'smem constant byte address 0x4 - core index']
  #allocation1 [shape = 'u32[144,128]{1,0:T(1,128)}', space=vmem, size = 0x12000, scoped, tag = 'internal scratch']
  %s0 = inlined_call_operand.vmem [shape: f32[64,16], index: 0, kind: input, shape index: {}]
  %s1 = inlined_call_operand.vmem [shape: f32[64,256], index: 1, kind: input, shape index: {}]
  %s2 = inlined_call_operand.vmem [shape: f32[64,112], index: 2, kind: input, shape index: {}]
  %s3 = inlined_call_operand.vmem [shape: f32[8,64], index: 3, kind: input, shape index: {}]
  %s4 = inlined_call_operand.vmem [shape: f32[2,64], index: 4, kind: input, shape index: {}]
  %s5 = inlined_call_operand.vmem [shape: f32[16,256], index: 5, kind: input, shape index: {}]
  %s6 = inlined_call_operand.vmem [shape: f32[256,384], index: 6, kind: input, shape index: {}]
  %s7 = inlined_call_operand.vmem [shape: f32[384,112], index: 7, kind: input, shape index: {}]
  %s8 = inlined_call_operand.vmem [shape: f32[112,7], index: 8, kind: input, shape index: {}]
  %s9 = inlined_call_operand.hbm [shape: f32[2,7], index: 9, kind: output, shape index: {}]
  %s10 = sld [smem:[#allocation0]]
  $region46: #{network_forward.1} parent=0
    _
  %s12 = ssub.s32 1, %s10
  %s13 = scalar_select 0, %s12, %s10
  $region1: #{network_forward.1} parent=0
    #allocation2 [shape = 'u8[1024]{0}', space=vmem, size = 0x400, scoped, tag = 'output window, operand 0, single buffered']
    #allocation3 [shape = 's32[1]{0}', space=sflag, size = 0x4, scoped, tag = 'scoped memory for network_forward.1']
    %14 = vsyncpa [#allocation3], 0
    // Predicated region
    $region2: #{network_forward.1} parent=1 // pred_check
      _
    $region3: #{network_forward.1} parent=1 // pred_check_branch
      %16 = sbr.rel (0) target = $region5
    $region4: #{network_forward.1} parent=1 // pred_region
      _
    $region5: #{network_forward.1} parent=1 // pred_fallthru
      _
    // Predicated region
    $region6: #{network_forward.1} parent=1 // pred_check
      _
    $region7: #{network_forward.1} parent=1 // pred_check_branch
      %18 = sbr.rel (0) target = $region9
    $region8: #{network_forward.1} parent=1 // pred_region
      _
    $region9: #{network_forward.1} parent=1 // pred_fallthru
      _
    // Predicated region
    $region10: #{network_forward.1} parent=1 // pred_check
      _
    $region11: #{network_forward.1} parent=1 // pred_check_branch
      %20 = sbr.rel (0) target = $region13
    $region12: #{network_forward.1} parent=1 // pred_region
      _
    $region13: #{network_forward.1} parent=1 // pred_fallthru
      _
    // Predicated region
    $region14: #{network_forward.1} parent=1 // pred_check
      _
    $region15: #{network_forward.1} parent=1 // pred_check_branch
      %22 = sbr.rel (0) target = $region17
    $region16: #{network_forward.1} parent=1 // pred_region
      _
    $region17: #{network_forward.1} parent=1 // pred_fallthru
      _
    // Predicated region
    $region18: #{network_forward.1} parent=1 // pred_check
      _
    $region19: #{network_forward.1} parent=1 // pred_check_branch
      %24 = sbr.rel (0) target = $region21
    $region20: #{network_forward.1} parent=1 // pred_region
      _
    $region21: #{network_forward.1} parent=1 // pred_fallthru
      _
    // Predicated region
    $region22: #{network_forward.1} parent=1 // pred_check
      _
    $region23: #{network_forward.1} parent=1 // pred_check_branch
      %26 = sbr.rel (0) target = $region25
    $region24: #{network_forward.1} parent=1 // pred_region
      _
    $region25: #{network_forward.1} parent=1 // pred_fallthru
      _
    // Predicated region
    $region26: #{network_forward.1} parent=1 // pred_check
      _
    $region27: #{network_forward.1} parent=1 // pred_check_branch
      %28 = sbr.rel (0) target = $region29
    $region28: #{network_forward.1} parent=1 // pred_region
      _
    $region29: #{network_forward.1} parent=1 // pred_fallthru
      _
    // Predicated region
    $region30: #{network_forward.1} parent=1 // pred_check
      _
    $region31: #{network_forward.1} parent=1 // pred_check_branch
      %30 = sbr.rel (0) target = $region33
    $region32: #{network_forward.1} parent=1 // pred_region
      _
    $region33: #{network_forward.1} parent=1 // pred_fallthru
      _
    // Predicated region
    $region34: #{network_forward.1} parent=1 // pred_check
      _
    $region35: #{network_forward.1} parent=1 // pred_check_branch
      %32 = sbr.rel (0) target = $region37
    $region36: #{network_forward.1} parent=1 // pred_region
      _
    $region37: #{network_forward.1} parent=1 // pred_fallthru
      _
    %v33 = vld [vmem:[%s3] sm:$0xff]
    %v34 = vld [vmem:[%s0] sm:$0xff]
    %v35 = vld [vmem:[%s0 + $0x8] sm:$0xff]
    %v36 = vld [vmem:[%s0 + $0x10] sm:$0xff]
    %v37 = vld [vmem:[%s0 + $0x18] sm:$0xff]
    %v38 = vld [vmem:[%s0 + $0x20] sm:$0xff]
    %v39 = vld [vmem:[%s0 + $0x28] sm:$0xff]
    %v40 = vld [vmem:[%s0 + $0x30] sm:$0xff]
    %v41 = vld [vmem:[%s0 + $0x38] sm:$0xff]
    %vm42 = vcmask 523264
    %v44 = vsel %vm42, %v33, 0
    %46 = vmatprep.subr.mxu0 0.0
    %47 = vmatpush1.msra.mxu0 0.0
    %48 = vmatprep.subr.mxu0 0.0
    %49 = vmatpush1.msra.mxu0 0.0
    %50 = vmatprep.subr.mxu0 0.0
    %51 = vmatpush1.msra.mxu0 0.0
    %52 = vmatprep.subr.mxu0 0.0
    %53 = vmatpush1.msra.mxu0 0.0
    %54 = vmatprep.subr.mxu0 0.0
    %55 = vmatpush1.msra.mxu0 0.0
    %56 = vmatprep.subr.mxu0 0.0
    %57 = vmatpush1.msra.mxu0 0.0
    %58 = vmatprep.subr.mxu0 0.0
    %59 = vmatpush1.msra.mxu0 0.0
    %60 = vmatprep.subr.mxu0 0.0
    %61 = vmatpush1.msra.mxu0 0.0
    %62 = vmatprep.subr.mxu0 0.0
    %63 = vmatpush1.msra.mxu0 %v41
    %64 = vmatprep.subr.mxu0 0.0
    %65 = vmatpush1.msra.mxu0 %v40
    %66 = vmatprep.subr.mxu0 0.0
    %67 = vmatpush1.msra.mxu0 %v39
    %68 = vmatprep.subr.mxu0 0.0
    %69 = vmatpush1.msra.mxu0 %v38
    %70 = vmatprep.subr.mxu0 0.0
    %71 = vmatpush1.msra.mxu0 %v37
    %72 = vmatprep.subr.mxu0 0.0
    %73 = vmatpush1.msra.mxu0 %v36
    %74 = vmatprep.subr.mxu0 0.0
    %75 = vmatpush1.msra.mxu0 %v35
    %76 = vmatprep.subr.mxu0 0.0
    %77 = vmatpush1.msra.mxu0 %v34
    %78 = vmatprep.subr.mxu0 0.0
    %79 = vmatpush2.msra.mxu0 0.0
    %80 = vmatprep.subr.mxu0 0.0
    %81 = vmatpush2.msra.mxu0 0.0
    %82 = vmatprep.subr.mxu0 0.0
    %83 = vmatpush2.msra.mxu0 0.0
    %84 = vmatprep.subr.mxu0 0.0
    %85 = vmatpush2.msra.mxu0 0.0
    %86 = vmatprep.subr.mxu0 0.0
    %87 = vmatpush2.msra.mxu0 0.0
    %88 = vmatprep.subr.mxu0 0.0
    %89 = vmatpush2.msra.mxu0 0.0
    %90 = vmatprep.subr.mxu0 0.0
    %91 = vmatpush2.msra.mxu0 0.0
    %92 = vmatprep.subr.mxu0 0.0
    %93 = vmatpush2.msra.mxu0 0.0
    %94 = vmatprep.subr.mxu0 0.0
    %95 = vmatpush2.msra.mxu0 0.0
    %96 = vmatprep.subr.mxu0 0.0
    %97 = vmatpush2.msra.mxu0 0.0
    %98 = vmatprep.subr.mxu0 0.0
    %99 = vmatpush2.msra.mxu0 0.0
    %100 = vmatprep.subr.mxu0 0.0
    %101 = vmatpush2.msra.mxu0 0.0
    %102 = vmatprep.subr.mxu0 0.0
    %103 = vmatpush2.msra.mxu0 0.0
    %104 = vmatprep.subr.mxu0 0.0
    %105 = vmatpush2.msra.mxu0 0.0
    %106 = vmatprep.subr.mxu0 0.0
    %107 = vmatpush2.msra.mxu0 0.0
    %108 = vmatprep.subr.mxu0 0.0
    %109 = vmatpush2.msra.mxu0 0.0
    %110 = vmatprep.mubr.f32.mxu0 0.0
    %111 = vmatmul.mubr.f32.gmra.mxu0 %v44
    %v112 = vpop.f32.mrf.mxu0
    %v113 = vadd.f32 0.0, %v112
    %v114 = vpop.f32.mrf.mxu0
    %115 = vdwg.mxu0
    %v116 = vld [vmem:[%s5] sm:$0xff]
    %v117 = vld [vmem:[%s5 + $0x8] sm:$0xff]
    %v118 = vld [vmem:[%s5 + $0x10] sm:$0xff]
    %v119 = vld [vmem:[%s5 + $0x18] sm:$0xff]
    %vm120 = vcmask 130048
    %v122 = vsel %vm120, %v113, 0
    %124 = vmatprep.subr.mxu0 0.0
    %125 = vmatpush1.msra.mxu0 0.0
    %126 = vmatprep.subr.mxu0 0.0
    %127 = vmatpush1.msra.mxu0 0.0
    %128 = vmatprep.subr.mxu0 0.0
    %129 = vmatpush1.msra.mxu0 0.0
    %130 = vmatprep.subr.mxu0 0.0
    %131 = vmatpush1.msra.mxu0 0.0
    %132 = vmatprep.subr.mxu0 0.0
    %133 = vmatpush1.msra.mxu0 0.0
    %134 = vmatprep.subr.mxu0 0.0
    %135 = vmatpush1.msra.mxu0 0.0
    %136 = vmatprep.subr.mxu0 0.0
    %137 = vmatpush1.msra.mxu0 0.0
    %138 = vmatprep.subr.mxu0 0.0
    %139 = vmatpush1.msra.mxu0 0.0
    %140 = vmatprep.subr.mxu0 0.0
    %141 = vmatpush1.msra.mxu0 0.0
    %142 = vmatprep.subr.mxu0 0.0
    %143 = vmatpush1.msra.mxu0 0.0
    %144 = vmatprep.subr.mxu0 0.0
    %145 = vmatpush1.msra.mxu0 0.0
    %146 = vmatprep.subr.mxu0 0.0
    %147 = vmatpush1.msra.mxu0 0.0
    %148 = vmatprep.subr.mxu0 0.0
    %149 = vmatpush1.msra.mxu0 0.0
    %150 = vmatprep.subr.mxu0 0.0
    %151 = vmatpush1.msra.mxu0 0.0
    %152 = vmatprep.subr.mxu0 %v119
    %153 = vmatpush1.msra.mxu0 %v118
    %154 = vmatprep.subr.mxu0 %v117
    %155 = vmatpush1.msra.mxu0 %v116
    %156 = vmatprep.subr.mxu0 0.0
    %157 = vmatpush2.msra.mxu0 0.0
    %158 = vmatprep.subr.mxu0 0.0
    %159 = vmatpush2.msra.mxu0 0.0
    %160 = vmatprep.subr.mxu0 0.0
    %161 = vmatpush2.msra.mxu0 0.0
    %162 = vmatprep.subr.mxu0 0.0
    %163 = vmatpush2.msra.mxu0 0.0
    %164 = vmatprep.subr.mxu0 0.0
    %165 = vmatpush2.msra.mxu0 0.0
    %166 = vmatprep.subr.mxu0 0.0
    %167 = vmatpush2.msra.mxu0 0.0
    %168 = vmatprep.subr.mxu0 0.0
    %169 = vmatpush2.msra.mxu0 0.0
    %170 = vmatprep.subr.mxu0 0.0
    %171 = vmatpush2.msra.mxu0 0.0
    %172 = vmatprep.subr.mxu0 0.0
    %173 = vmatpush2.msra.mxu0 0.0
    %174 = vmatprep.subr.mxu0 0.0
    %175 = vmatpush2.msra.mxu0 0.0
    %176 = vmatprep.subr.mxu0 0.0
    %177 = vmatpush2.msra.mxu0 0.0
    %178 = vmatprep.subr.mxu0 0.0
    %179 = vmatpush2.msra.mxu0 0.0
    %180 = vmatprep.subr.mxu0 0.0
    %181 = vmatpush2.msra.mxu0 0.0
    %182 = vmatprep.subr.mxu0 0.0
    %183 = vmatpush2.msra.mxu0 0.0
    %184 = vmatprep.subr.mxu0 0.0
    %185 = vmatpush2.msra.mxu0 0.0
    %186 = vmatprep.subr.mxu0 0.0
    %187 = vmatpush2.msra.mxu0 0.0
    %188 = vmatprep.mubr.f32.mxu0 0.0
    %189 = vmatmul.mubr.f32.gmra.mxu0 %v122
    %v190 = vpop.f32.mrf.mxu0
    %v191 = vadd.f32 0.0, %v190
    %v192 = vpop.f32.mrf.mxu0
    %v193 = vadd.f32 0.0, %v192
    %194 = vdwg.mxu0
    %v195 = vld [vmem:[%s1] sm:$0xff]
    %v196 = vld [vmem:[%s1 + $0x8] sm:$0xff]
    %v197 = vld [vmem:[%s1 + $0x10] sm:$0xff]
    %v198 = vld [vmem:[%s1 + $0x18] sm:$0xff]
    %v199 = vld [vmem:[%s1 + $0x20] sm:$0xff]
    %v200 = vld [vmem:[%s1 + $0x28] sm:$0xff]
    %v201 = vld [vmem:[%s1 + $0x30] sm:$0xff]
    %v202 = vld [vmem:[%s1 + $0x38] sm:$0xff]
    %v203 = vld [vmem:[%s1 + $0x40] sm:$0xff]
    %v204 = vld [vmem:[%s1 + $0x48] sm:$0xff]
    %v205 = vld [vmem:[%s1 + $0x50] sm:$0xff]
    %v206 = vld [vmem:[%s1 + $0x58] sm:$0xff]
    %v207 = vld [vmem:[%s1 + $0x60] sm:$0xff]
    %v208 = vld [vmem:[%s1 + $0x68] sm:$0xff]
    %v209 = vld [vmem:[%s1 + $0x70] sm:$0xff]
    %v210 = vld [vmem:[%s1 + $0x78] sm:$0xff]
    %v211 = vmul.f32 %v191, %v195
    %v212 = vmul.f32 %v193, %v196
    %v213 = vmul.f32 %v191, %v197
    %v214 = vmul.f32 %v193, %v198
    %v215 = vmul.f32 %v191, %v199
    %v216 = vmul.f32 %v193, %v200
    %v217 = vmul.f32 %v191, %v201
    %v218 = vmul.f32 %v193, %v202
    %v219 = vmul.f32 %v191, %v203
    %v220 = vmul.f32 %v193, %v204
    %v221 = vmul.f32 %v191, %v205
    %v222 = vmul.f32 %v193, %v206
    %v223 = vmul.f32 %v191, %v207
    %v224 = vmul.f32 %v193, %v208
    %v225 = vmul.f32 %v191, %v209
    %v226 = vmul.f32 %v193, %v210
    %227 = vmatprep.subr.mxu0 0.0
    %228 = vmatpush1.msra.mxu0 0.0
    %229 = vmatprep.subr.mxu0 0.0
    %230 = vmatpush1.msra.mxu0 0.0
    %231 = vmatprep.subr.mxu0 0.0
    %232 = vmatpush1.msra.mxu0 0.0
    %233 = vmatprep.subr.mxu0 0.0
    %234 = vmatpush1.msra.mxu0 0.0
    %235 = vmatprep.subr.mxu0 0.0
    %236 = vmatpush1.msra.mxu0 0.0
    %237 = vmatprep.subr.mxu0 0.0
    %238 = vmatpush1.msra.mxu0 0.0
    %239 = vmatprep.subr.mxu0 0.0
    %240 = vmatpush1.msra.mxu0 0.0
    %241 = vmatprep.subr.mxu0 0.0
    %242 = vmatpush1.msra.mxu0 0.0
    %243 = vmatprep.subr.mxu0 %v226
    %244 = vmatpush1.msra.mxu0 %v225
    %245 = vmatprep.subr.mxu0 %v224
    %246 = vmatpush1.msra.mxu0 %v223
    %247 = vmatprep.subr.mxu0 %v222
    %248 = vmatpush1.msra.mxu0 %v221
    %249 = vmatprep.subr.mxu0 %v220
    %250 = vmatpush1.msra.mxu0 %v219
    %251 = vmatprep.subr.mxu0 %v218
    %252 = vmatpush1.msra.mxu0 %v217
    %253 = vmatprep.subr.mxu0 %v216
    %254 = vmatpush1.msra.mxu0 %v215
    %255 = vmatprep.subr.mxu0 %v214
    %256 = vmatpush1.msra.mxu0 %v213
    %257 = vmatprep.subr.mxu0 %v212
    %258 = vmatpush1.msra.mxu0 %v211
    %259 = vmatprep.subr.mxu0 0.0
    %260 = vmatpush2.msra.mxu0 0.0
    %261 = vmatprep.subr.mxu0 0.0
    %262 = vmatpush2.msra.mxu0 0.0
    %263 = vmatprep.subr.mxu0 0.0
    %264 = vmatpush2.msra.mxu0 0.0
    %265 = vmatprep.subr.mxu0 0.0
    %266 = vmatpush2.msra.mxu0 0.0
    %267 = vmatprep.subr.mxu0 0.0
    %268 = vmatpush2.msra.mxu0 0.0
    %269 = vmatprep.subr.mxu0 0.0
    %270 = vmatpush2.msra.mxu0 0.0
    %271 = vmatprep.subr.mxu0 0.0
    %272 = vmatpush2.msra.mxu0 0.0
    %273 = vmatprep.subr.mxu0 0.0
    %274 = vmatpush2.msra.mxu0 0.0
    %275 = vmatprep.subr.mxu0 0.0
    %276 = vmatpush2.msra.mxu0 0.0
    %277 = vmatprep.subr.mxu0 0.0
    %278 = vmatpush2.msra.mxu0 0.0
    %279 = vmatprep.subr.mxu0 0.0
    %280 = vmatpush2.msra.mxu0 0.0
    %281 = vmatprep.subr.mxu0 0.0
    %282 = vmatpush2.msra.mxu0 0.0
    %283 = vmatprep.subr.mxu0 0.0
    %284 = vmatpush2.msra.mxu0 0.0
    %285 = vmatprep.subr.mxu0 0.0
    %286 = vmatpush2.msra.mxu0 0.0
    %287 = vmatprep.subr.mxu0 0.0
    %288 = vmatpush2.msra.mxu0 0.0
    %289 = vmatprep.subr.mxu0 0.0
    %290 = vmatpush2.msra.mxu0 0.0
    %291 = vmatprep.mubr.f32.mxu0 0.0
    %292 = vmatmul.mubr.f32.gmra.mxu0 %v44
    %v293 = vpop.f32.mrf.mxu0
    %v294 = vadd.f32 0.0, %v293
    %v295 = vpop.f32.mrf.mxu0
    %v296 = vadd.f32 0.0, %v295
    %297 = vdwg.mxu0
    %v298 = vld [vmem:[%s6] sm:$0xff]
    %v299 = vld [vmem:[%s6 + $0x8] sm:$0xff]
    %v300 = vld [vmem:[%s6 + $0x10] sm:$0xff]
    %v301 = vld [vmem:[%s6 + $0x18] sm:$0xff]
    %v302 = vld [vmem:[%s6 + $0x20] sm:$0xff]
    %v303 = vld [vmem:[%s6 + $0x28] sm:$0xff]
    %v304 = vld [vmem:[%s6 + $0x30] sm:$0xff]
    %v305 = vld [vmem:[%s6 + $0x38] sm:$0xff]
    %v306 = vld [vmem:[%s6 + $0x40] sm:$0xff]
    %v307 = vld [vmem:[%s6 + $0x48] sm:$0xff]
    %v308 = vld [vmem:[%s6 + $0x50] sm:$0xff]
    %v309 = vld [vmem:[%s6 + $0x58] sm:$0xff]
    %v310 = vld [vmem:[%s6 + $0x60] sm:$0xff]
    %v311 = vld [vmem:[%s6 + $0x68] sm:$0xff]
    %v312 = vld [vmem:[%s6 + $0x70] sm:$0xff]
    %v313 = vld [vmem:[%s6 + $0x78] sm:$0xff]
    %v314 = vld [vmem:[%s6 + $0x80] sm:$0xff]
    %v315 = vld [vmem:[%s6 + $0x88] sm:$0xff]
    %v316 = vld [vmem:[%s6 + $0x90] sm:$0xff]
    %v317 = vld [vmem:[%s6 + $0x98] sm:$0xff]
    %v318 = vld [vmem:[%s6 + $0xa0] sm:$0xff]
    %v319 = vld [vmem:[%s6 + $0xa8] sm:$0xff]
    %v320 = vld [vmem:[%s6 + $0xb0] sm:$0xff]
    %v321 = vld [vmem:[%s6 + $0xb8] sm:$0xff]
    %v322 = vld [vmem:[%s6 + $0xc0] sm:$0xff]
    %v323 = vld [vmem:[%s6 + $0xc8] sm:$0xff]
    %v324 = vld [vmem:[%s6 + $0xd0] sm:$0xff]
    %v325 = vld [vmem:[%s6 + $0xd8] sm:$0xff]
    %v326 = vld [vmem:[%s6 + $0xe0] sm:$0xff]
    %v327 = vld [vmem:[%s6 + $0xe8] sm:$0xff]
    %v328 = vld [vmem:[%s6 + $0xf0] sm:$0xff]
    %v329 = vld [vmem:[%s6 + $0xf8] sm:$0xff]
    %v330 = vld [vmem:[%s6 + $0x100] sm:$0xff]
    %v331 = vld [vmem:[%s6 + $0x108] sm:$0xff]
    %v332 = vld [vmem:[%s6 + $0x110] sm:$0xff]
    %v333 = vld [vmem:[%s6 + $0x118] sm:$0xff]
    %v334 = vld [vmem:[%s6 + $0x120] sm:$0xff]
    %v335 = vld [vmem:[%s6 + $0x128] sm:$0xff]
    %v336 = vld [vmem:[%s6 + $0x130] sm:$0xff]
    %v337 = vld [vmem:[%s6 + $0x138] sm:$0xff]
    %v338 = vld [vmem:[%s6 + $0x140] sm:$0xff]
    %v339 = vld [vmem:[%s6 + $0x148] sm:$0xff]
    %v340 = vld [vmem:[%s6 + $0x150] sm:$0xff]
    %v341 = vld [vmem:[%s6 + $0x158] sm:$0xff]
    %v342 = vld [vmem:[%s6 + $0x160] sm:$0xff]
    %v343 = vld [vmem:[%s6 + $0x168] sm:$0xff]
    %v344 = vld [vmem:[%s6 + $0x170] sm:$0xff]
    %v345 = vld [vmem:[%s6 + $0x178] sm:$0xff]
    %v346 = vld [vmem:[%s6 + $0x180] sm:$0xff]
    %v347 = vld [vmem:[%s6 + $0x188] sm:$0xff]
    %v348 = vld [vmem:[%s6 + $0x190] sm:$0xff]
    %v349 = vld [vmem:[%s6 + $0x198] sm:$0xff]
    %v350 = vld [vmem:[%s6 + $0x1a0] sm:$0xff]
    %v351 = vld [vmem:[%s6 + $0x1a8] sm:$0xff]
    %v352 = vld [vmem:[%s6 + $0x1b0] sm:$0xff]
    %v353 = vld [vmem:[%s6 + $0x1b8] sm:$0xff]
    %v354 = vld [vmem:[%s6 + $0x1c0] sm:$0xff]
    %v355 = vld [vmem:[%s6 + $0x1c8] sm:$0xff]
    %v356 = vld [vmem:[%s6 + $0x1d0] sm:$0xff]
    %v357 = vld [vmem:[%s6 + $0x1d8] sm:$0xff]
    %v358 = vld [vmem:[%s6 + $0x1e0] sm:$0xff]
    %v359 = vld [vmem:[%s6 + $0x1e8] sm:$0xff]
    %v360 = vld [vmem:[%s6 + $0x1f0] sm:$0xff]
    %v361 = vld [vmem:[%s6 + $0x1f8] sm:$0xff]
    %v362 = vld [vmem:[%s6 + $0x200] sm:$0xff]
    %v363 = vld [vmem:[%s6 + $0x208] sm:$0xff]
    %v364 = vld [vmem:[%s6 + $0x210] sm:$0xff]
    %v365 = vld [vmem:[%s6 + $0x218] sm:$0xff]
    %v366 = vld [vmem:[%s6 + $0x220] sm:$0xff]
    %v367 = vld [vmem:[%s6 + $0x228] sm:$0xff]
    %v368 = vld [vmem:[%s6 + $0x230] sm:$0xff]
    %v369 = vld [vmem:[%s6 + $0x238] sm:$0xff]
    %v370 = vld [vmem:[%s6 + $0x240] sm:$0xff]
    %v371 = vld [vmem:[%s6 + $0x248] sm:$0xff]
    %v372 = vld [vmem:[%s6 + $0x250] sm:$0xff]
    %v373 = vld [vmem:[%s6 + $0x258] sm:$0xff]
    %v374 = vld [vmem:[%s6 + $0x260] sm:$0xff]
    %v375 = vld [vmem:[%s6 + $0x268] sm:$0xff]
    %v376 = vld [vmem:[%s6 + $0x270] sm:$0xff]
    %v377 = vld [vmem:[%s6 + $0x278] sm:$0xff]
    %v378 = vld [vmem:[%s6 + $0x280] sm:$0xff]
    %v379 = vld [vmem:[%s6 + $0x288] sm:$0xff]
    %v380 = vld [vmem:[%s6 + $0x290] sm:$0xff]
    %v381 = vld [vmem:[%s6 + $0x298] sm:$0xff]
    %v382 = vld [vmem:[%s6 + $0x2a0] sm:$0xff]
    %v383 = vld [vmem:[%s6 + $0x2a8] sm:$0xff]
    %v384 = vld [vmem:[%s6 + $0x2b0] sm:$0xff]
    %v385 = vld [vmem:[%s6 + $0x2b8] sm:$0xff]
    %v386 = vld [vmem:[%s6 + $0x2c0] sm:$0xff]
    %v387 = vld [vmem:[%s6 + $0x2c8] sm:$0xff]
    %v388 = vld [vmem:[%s6 + $0x2d0] sm:$0xff]
    %v389 = vld [vmem:[%s6 + $0x2d8] sm:$0xff]
    %v390 = vld [vmem:[%s6 + $0x2e0] sm:$0xff]
    %v391 = vld [vmem:[%s6 + $0x2e8] sm:$0xff]
    %v392 = vld [vmem:[%s6 + $0x2f0] sm:$0xff]
    %v393 = vld [vmem:[%s6 + $0x2f8] sm:$0xff]
    %394 = vmatprep.subr.mxu0 %v344
    %395 = vmatpush1.msra.mxu0 %v343
    %396 = vmatprep.subr.mxu0 %v341
    %397 = vmatpush1.msra.mxu0 %v340
    %398 = vmatprep.subr.mxu0 %v338
    %399 = vmatpush1.msra.mxu0 %v337
    %400 = vmatprep.subr.mxu0 %v335
    %401 = vmatpush1.msra.mxu0 %v334
    %402 = vmatprep.subr.mxu0 %v332
    %403 = vmatpush1.msra.mxu0 %v331
    %404 = vmatprep.subr.mxu0 %v329
    %405 = vmatpush1.msra.mxu0 %v328
    %406 = vmatprep.subr.mxu0 %v326
    %407 = vmatpush1.msra.mxu0 %v325
    %408 = vmatprep.subr.mxu0 %v323
    %409 = vmatpush1.msra.mxu0 %v322
    %410 = vmatprep.subr.mxu0 %v320
    %411 = vmatpush1.msra.mxu0 %v319
    %412 = vmatprep.subr.mxu0 %v317
    %413 = vmatpush1.msra.mxu0 %v316
    %414 = vmatprep.subr.mxu0 %v314
    %415 = vmatpush1.msra.mxu0 %v313
    %416 = vmatprep.subr.mxu0 %v311
    %417 = vmatpush1.msra.mxu0 %v310
    %418 = vmatprep.subr.mxu0 %v308
    %419 = vmatpush1.msra.mxu0 %v307
    %420 = vmatprep.subr.mxu0 %v305
    %421 = vmatpush1.msra.mxu0 %v304
    %422 = vmatprep.subr.mxu0 %v302
    %423 = vmatpush1.msra.mxu0 %v301
    %424 = vmatprep.subr.mxu0 %v299
    %425 = vmatpush1.msra.mxu0 %v298
    %426 = vmatprep.subr.mxu0 %v392
    %427 = vmatpush2.msra.mxu0 %v391
    %428 = vmatprep.subr.mxu0 %v389
    %429 = vmatpush2.msra.mxu0 %v388
    %430 = vmatprep.subr.mxu0 %v386
    %431 = vmatpush2.msra.mxu0 %v385
    %432 = vmatprep.subr.mxu0 %v383
    %433 = vmatpush2.msra.mxu0 %v382
    %434 = vmatprep.subr.mxu0 %v380
    %435 = vmatpush2.msra.mxu0 %v379
    %436 = vmatprep.subr.mxu0 %v377
    %437 = vmatpush2.msra.mxu0 %v376
    %438 = vmatprep.subr.mxu0 %v374
    %439 = vmatpush2.msra.mxu0 %v373
    %440 = vmatprep.subr.mxu0 %v371
    %441 = vmatpush2.msra.mxu0 %v370
    %442 = vmatprep.subr.mxu0 %v368
    %443 = vmatpush2.msra.mxu0 %v367
    %444 = vmatprep.subr.mxu0 %v365
    %445 = vmatpush2.msra.mxu0 %v364
    %446 = vmatprep.subr.mxu0 %v362
    %447 = vmatpush2.msra.mxu0 %v361
    %448 = vmatprep.subr.mxu0 %v359
    %449 = vmatpush2.msra.mxu0 %v358
    %450 = vmatprep.subr.mxu0 %v356
    %451 = vmatpush2.msra.mxu0 %v355
    %452 = vmatprep.subr.mxu0 %v353
    %453 = vmatpush2.msra.mxu0 %v352
    %454 = vmatprep.subr.mxu0 %v350
    %455 = vmatpush2.msra.mxu0 %v349
    %456 = vmatprep.subr.mxu0 %v347
    %457 = vmatpush2.msra.mxu0 %v346
    %458 = vmatprep.mubr.f32.mxu0 %v296
    %459 = vmatmul.mubr.f32.gmra.mxu0 %v294
    %v460 = vpop.f32.mrf.mxu0
    %v461 = vadd.f32 0.0, %v460
    %v462 = vpop.f32.mrf.mxu0
    %v463 = vadd.f32 0.0, %v462
    %464 = vdwg.mxu0
    %465 = vmatprep.subr.mxu0 0.0
    %466 = vmatpush1.msra.mxu0 %v345
    %467 = vmatprep.subr.mxu0 0.0
    %468 = vmatpush1.msra.mxu0 %v342
    %469 = vmatprep.subr.mxu0 0.0
    %470 = vmatpush1.msra.mxu0 %v339
    %471 = vmatprep.subr.mxu0 0.0
    %472 = vmatpush1.msra.mxu0 %v336
    %473 = vmatprep.subr.mxu0 0.0
    %474 = vmatpush1.msra.mxu0 %v333
    %475 = vmatprep.subr.mxu0 0.0
    %476 = vmatpush1.msra.mxu0 %v330
    %477 = vmatprep.subr.mxu0 0.0
    %478 = vmatpush1.msra.mxu0 %v327
    %479 = vmatprep.subr.mxu0 0.0
    %480 = vmatpush1.msra.mxu0 %v324
    %481 = vmatprep.subr.mxu0 0.0
    %482 = vmatpush1.msra.mxu0 %v321
    %483 = vmatprep.subr.mxu0 0.0
    %484 = vmatpush1.msra.mxu0 %v318
    %485 = vmatprep.subr.mxu0 0.0
    %486 = vmatpush1.msra.mxu0 %v315
    %487 = vmatprep.subr.mxu0 0.0
    %488 = vmatpush1.msra.mxu0 %v312
    %489 = vmatprep.subr.mxu0 0.0
    %490 = vmatpush1.msra.mxu0 %v309
    %491 = vmatprep.subr.mxu0 0.0
    %492 = vmatpush1.msra.mxu0 %v306
    %493 = vmatprep.subr.mxu0 0.0
    %494 = vmatpush1.msra.mxu0 %v303
    %495 = vmatprep.subr.mxu0 0.0
    %496 = vmatpush1.msra.mxu0 %v300
    %497 = vmatprep.subr.mxu0 0.0
    %498 = vmatpush2.msra.mxu0 %v393
    %499 = vmatprep.subr.mxu0 0.0
    %500 = vmatpush2.msra.mxu0 %v390
    %501 = vmatprep.subr.mxu0 0.0
    %502 = vmatpush2.msra.mxu0 %v387
    %503 = vmatprep.subr.mxu0 0.0
    %504 = vmatpush2.msra.mxu0 %v384
    %505 = vmatprep.subr.mxu0 0.0
    %506 = vmatpush2.msra.mxu0 %v381
    %507 = vmatprep.subr.mxu0 0.0
    %508 = vmatpush2.msra.mxu0 %v378
    %509 = vmatprep.subr.mxu0 0.0
    %510 = vmatpush2.msra.mxu0 %v375
    %511 = vmatprep.subr.mxu0 0.0
    %512 = vmatpush2.msra.mxu0 %v372
    %513 = vmatprep.subr.mxu0 0.0
    %514 = vmatpush2.msra.mxu0 %v369
    %515 = vmatprep.subr.mxu0 0.0
    %516 = vmatpush2.msra.mxu0 %v366
    %517 = vmatprep.subr.mxu0 0.0
    %518 = vmatpush2.msra.mxu0 %v363
    %519 = vmatprep.subr.mxu0 0.0
    %520 = vmatpush2.msra.mxu0 %v360
    %521 = vmatprep.subr.mxu0 0.0
    %522 = vmatpush2.msra.mxu0 %v357
    %523 = vmatprep.subr.mxu0 0.0
    %524 = vmatpush2.msra.mxu0 %v354
    %525 = vmatprep.subr.mxu0 0.0
    %526 = vmatpush2.msra.mxu0 %v351
    %527 = vmatprep.subr.mxu0 0.0
    %528 = vmatpush2.msra.mxu0 %v348
    %529 = vmatprep.mubr.f32.mxu0 %v296
    %530 = vmatmul.mubr.f32.gmra.mxu0 %v294
    %v531 = vpop.f32.mrf.mxu0
    %v532 = vadd.f32 0.0, %v531
    %v533 = vpop.f32.mrf.mxu0
    %534 = vdwg.mxu0
    %v535 = vld [vmem:[%s7] sm:$0xff]
    %v536 = vld [vmem:[%s7 + $0x8] sm:$0xff]
    %v537 = vld [vmem:[%s7 + $0x10] sm:$0xff]
    %v538 = vld [vmem:[%s7 + $0x18] sm:$0xff]
    %v539 = vld [vmem:[%s7 + $0x20] sm:$0xff]
    %v540 = vld [vmem:[%s7 + $0x28] sm:$0xff]
    %v541 = vld [vmem:[%s7 + $0x30] sm:$0xff]
    %v542 = vld [vmem:[%s7 + $0x38] sm:$0xff]
    %v543 = vld [vmem:[%s7 + $0x40] sm:$0xff]
    %v544 = vld [vmem:[%s7 + $0x48] sm:$0xff]
    %v545 = vld [vmem:[%s7 + $0x50] sm:$0xff]
    %v546 = vld [vmem:[%s7 + $0x58] sm:$0xff]
    %v547 = vld [vmem:[%s7 + $0x60] sm:$0xff]
    %v548 = vld [vmem:[%s7 + $0x68] sm:$0xff]
    %v549 = vld [vmem:[%s7 + $0x70] sm:$0xff]
    %v550 = vld [vmem:[%s7 + $0x78] sm:$0xff]
    %v551 = vld [vmem:[%s7 + $0x80] sm:$0xff]
    %v552 = vld [vmem:[%s7 + $0x88] sm:$0xff]
    %v553 = vld [vmem:[%s7 + $0x90] sm:$0xff]
    %v554 = vld [vmem:[%s7 + $0x98] sm:$0xff]
    %v555 = vld [vmem:[%s7 + $0xa0] sm:$0xff]
    %v556 = vld [vmem:[%s7 + $0xa8] sm:$0xff]
    %v557 = vld [vmem:[%s7 + $0xb0] sm:$0xff]
    %v558 = vld [vmem:[%s7 + $0xb8] sm:$0xff]
    %v559 = vld [vmem:[%s7 + $0xc0] sm:$0xff]
    %v560 = vld [vmem:[%s7 + $0xc8] sm:$0xff]
    %v561 = vld [vmem:[%s7 + $0xd0] sm:$0xff]
    %v562 = vld [vmem:[%s7 + $0xd8] sm:$0xff]
    %v563 = vld [vmem:[%s7 + $0xe0] sm:$0xff]
    %v564 = vld [vmem:[%s7 + $0xe8] sm:$0xff]
    %v565 = vld [vmem:[%s7 + $0xf0] sm:$0xff]
    %v566 = vld [vmem:[%s7 + $0xf8] sm:$0xff]
    %v567 = vld [vmem:[%s7 + $0x100] sm:$0xff]
    %v568 = vld [vmem:[%s7 + $0x108] sm:$0xff]
    %v569 = vld [vmem:[%s7 + $0x110] sm:$0xff]
    %v570 = vld [vmem:[%s7 + $0x118] sm:$0xff]
    %v571 = vld [vmem:[%s7 + $0x120] sm:$0xff]
    %v572 = vld [vmem:[%s7 + $0x128] sm:$0xff]
    %v573 = vld [vmem:[%s7 + $0x130] sm:$0xff]
    %v574 = vld [vmem:[%s7 + $0x138] sm:$0xff]
    %v575 = vld [vmem:[%s7 + $0x140] sm:$0xff]
    %v576 = vld [vmem:[%s7 + $0x148] sm:$0xff]
    %v577 = vld [vmem:[%s7 + $0x150] sm:$0xff]
    %v578 = vld [vmem:[%s7 + $0x158] sm:$0xff]
    %v579 = vld [vmem:[%s7 + $0x160] sm:$0xff]
    %v580 = vld [vmem:[%s7 + $0x168] sm:$0xff]
    %v581 = vld [vmem:[%s7 + $0x170] sm:$0xff]
    %v582 = vld [vmem:[%s7 + $0x178] sm:$0xff]
    %583 = vmatprep.subr.mxu0 0.0
    %584 = vmatpush1.msra.mxu0 %v550
    %585 = vmatprep.subr.mxu0 0.0
    %586 = vmatpush1.msra.mxu0 %v549
    %587 = vmatprep.subr.mxu0 0.0
    %588 = vmatpush1.msra.mxu0 %v548
    %589 = vmatprep.subr.mxu0 0.0
    %590 = vmatpush1.msra.mxu0 %v547
    %591 = vmatprep.subr.mxu0 0.0
    %592 = vmatpush1.msra.mxu0 %v546
    %593 = vmatprep.subr.mxu0 0.0
    %594 = vmatpush1.msra.mxu0 %v545
    %595 = vmatprep.subr.mxu0 0.0
    %596 = vmatpush1.msra.mxu0 %v544
    %597 = vmatprep.subr.mxu0 0.0
    %598 = vmatpush1.msra.mxu0 %v543
    %599 = vmatprep.subr.mxu0 0.0
    %600 = vmatpush1.msra.mxu0 %v542
    %601 = vmatprep.subr.mxu0 0.0
    %602 = vmatpush1.msra.mxu0 %v541
    %603 = vmatprep.subr.mxu0 0.0
    %604 = vmatpush1.msra.mxu0 %v540
    %605 = vmatprep.subr.mxu0 0.0
    %606 = vmatpush1.msra.mxu0 %v539
    %607 = vmatprep.subr.mxu0 0.0
    %608 = vmatpush1.msra.mxu0 %v538
    %609 = vmatprep.subr.mxu0 0.0
    %610 = vmatpush1.msra.mxu0 %v537
    %611 = vmatprep.subr.mxu0 0.0
    %612 = vmatpush1.msra.mxu0 %v536
    %613 = vmatprep.subr.mxu0 0.0
    %614 = vmatpush1.msra.mxu0 %v535
    %615 = vmatprep.subr.mxu0 0.0
    %616 = vmatpush2.msra.mxu0 %v566
    %617 = vmatprep.subr.mxu0 0.0
    %618 = vmatpush2.msra.mxu0 %v565
    %619 = vmatprep.subr.mxu0 0.0
    %620 = vmatpush2.msra.mxu0 %v564
    %621 = vmatprep.subr.mxu0 0.0
    %622 = vmatpush2.msra.mxu0 %v563
    %623 = vmatprep.subr.mxu0 0.0
    %624 = vmatpush2.msra.mxu0 %v562
    %625 = vmatprep.subr.mxu0 0.0
    %626 = vmatpush2.msra.mxu0 %v561
    %627 = vmatprep.subr.mxu0 0.0
    %628 = vmatpush2.msra.mxu0 %v560
    %629 = vmatprep.subr.mxu0 0.0
    %630 = vmatpush2.msra.mxu0 %v559
    %631 = vmatprep.subr.mxu0 0.0
    %632 = vmatpush2.msra.mxu0 %v558
    %633 = vmatprep.subr.mxu0 0.0
    %634 = vmatpush2.msra.mxu0 %v557
    %635 = vmatprep.subr.mxu0 0.0
    %636 = vmatpush2.msra.mxu0 %v556
    %637 = vmatprep.subr.mxu0 0.0
    %638 = vmatpush2.msra.mxu0 %v555
    %639 = vmatprep.subr.mxu0 0.0
    %640 = vmatpush2.msra.mxu0 %v554
    %641 = vmatprep.subr.mxu0 0.0
    %642 = vmatpush2.msra.mxu0 %v553
    %643 = vmatprep.subr.mxu0 0.0
    %644 = vmatpush2.msra.mxu0 %v552
    %645 = vmatprep.subr.mxu0 0.0
    %646 = vmatpush2.msra.mxu0 %v551
    %647 = vmatprep.mubr.f32.mxu0 %v463
    %648 = vmatmul.mubr.f32.gmra.mxu0 %v461
    %v649 = vpop.f32.mrf.mxu0
    %v650 = vadd.f32 0.0, %v649
    %v651 = vpop.f32.mrf.mxu0
    %652 = vdwg.mxu0
    %653 = vmatprep.subr.mxu0 0.0
    %654 = vmatpush1.msra.mxu0 %v582
    %655 = vmatprep.subr.mxu0 0.0
    %656 = vmatpush1.msra.mxu0 %v581
    %657 = vmatprep.subr.mxu0 0.0
    %658 = vmatpush1.msra.mxu0 %v580
    %659 = vmatprep.subr.mxu0 0.0
    %660 = vmatpush1.msra.mxu0 %v579
    %661 = vmatprep.subr.mxu0 0.0
    %662 = vmatpush1.msra.mxu0 %v578
    %663 = vmatprep.subr.mxu0 0.0
    %664 = vmatpush1.msra.mxu0 %v577
    %665 = vmatprep.subr.mxu0 0.0
    %666 = vmatpush1.msra.mxu0 %v576
    %667 = vmatprep.subr.mxu0 0.0
    %668 = vmatpush1.msra.mxu0 %v575
    %669 = vmatprep.subr.mxu0 0.0
    %670 = vmatpush1.msra.mxu0 %v574
    %671 = vmatprep.subr.mxu0 0.0
    %672 = vmatpush1.msra.mxu0 %v573
    %673 = vmatprep.subr.mxu0 0.0
    %674 = vmatpush1.msra.mxu0 %v572
    %675 = vmatprep.subr.mxu0 0.0
    %676 = vmatpush1.msra.mxu0 %v571
    %677 = vmatprep.subr.mxu0 0.0
    %678 = vmatpush1.msra.mxu0 %v570
    %679 = vmatprep.subr.mxu0 0.0
    %680 = vmatpush1.msra.mxu0 %v569
    %681 = vmatprep.subr.mxu0 0.0
    %682 = vmatpush1.msra.mxu0 %v568
    %683 = vmatprep.subr.mxu0 0.0
    %684 = vmatpush1.msra.mxu0 %v567
    %685 = vmatprep.subr.mxu0 0.0
    %686 = vmatpush2.msra.mxu0 0.0
    %687 = vmatprep.subr.mxu0 0.0
    %688 = vmatpush2.msra.mxu0 0.0
    %689 = vmatprep.subr.mxu0 0.0
    %690 = vmatpush2.msra.mxu0 0.0
    %691 = vmatprep.subr.mxu0 0.0
    %692 = vmatpush2.msra.mxu0 0.0
    %693 = vmatprep.subr.mxu0 0.0
    %694 = vmatpush2.msra.mxu0 0.0
    %695 = vmatprep.subr.mxu0 0.0
    %696 = vmatpush2.msra.mxu0 0.0
    %697 = vmatprep.subr.mxu0 0.0
    %698 = vmatpush2.msra.mxu0 0.0
    %699 = vmatprep.subr.mxu0 0.0
    %700 = vmatpush2.msra.mxu0 0.0
    %701 = vmatprep.subr.mxu0 0.0
    %702 = vmatpush2.msra.mxu0 0.0
    %703 = vmatprep.subr.mxu0 0.0
    %704 = vmatpush2.msra.mxu0 0.0
    %705 = vmatprep.subr.mxu0 0.0
    %706 = vmatpush2.msra.mxu0 0.0
    %707 = vmatprep.subr.mxu0 0.0
    %708 = vmatpush2.msra.mxu0 0.0
    %709 = vmatprep.subr.mxu0 0.0
    %710 = vmatpush2.msra.mxu0 0.0
    %711 = vmatprep.subr.mxu0 0.0
    %712 = vmatpush2.msra.mxu0 0.0
    %713 = vmatprep.subr.mxu0 0.0
    %714 = vmatpush2.msra.mxu0 0.0
    %715 = vmatprep.subr.mxu0 0.0
    %716 = vmatpush2.msra.mxu0 0.0
    %717 = vmatprep.mubr.f32.mxu0 0.0
    %718 = vmatmul.mubr.f32.gmra.mxu0 %v532
    %v719 = vpop.f32.mrf.mxu0
    %v720 = vadd.f32 %v650, %v719
    %v721 = vpop.f32.mrf.mxu0
    %722 = vdwg.mxu0
    %v723 = vld [vmem:[%s2] sm:$0xff]
    %v724 = vld [vmem:[%s2 + $0x8] sm:$0xff]
    %v725 = vld [vmem:[%s2 + $0x10] sm:$0xff]
    %v726 = vld [vmem:[%s2 + $0x18] sm:$0xff]
    %v727 = vld [vmem:[%s2 + $0x20] sm:$0xff]
    %v728 = vld [vmem:[%s2 + $0x28] sm:$0xff]
    %v729 = vld [vmem:[%s2 + $0x30] sm:$0xff]
    %v730 = vld [vmem:[%s2 + $0x38] sm:$0xff]
    %v731 = vmul.f32 %v720, %v723
    %v732 = vmul.f32 %v720, %v724
    %v733 = vmul.f32 %v720, %v725
    %v734 = vmul.f32 %v720, %v726
    %v735 = vmul.f32 %v720, %v727
    %v736 = vmul.f32 %v720, %v728
    %v737 = vmul.f32 %v720, %v729
    %v738 = vmul.f32 %v720, %v730
    %v739 = vld [vmem:[%s4] sm:$0x3]
    %v741 = vsel %vm42, %v739, 0
    %743 = vmatprep.subr.mxu0 0.0
    %744 = vmatpush1.msra.mxu0 0.0
    %745 = vmatprep.subr.mxu0 0.0
    %746 = vmatpush1.msra.mxu0 0.0
    %747 = vmatprep.subr.mxu0 0.0
    %748 = vmatpush1.msra.mxu0 0.0
    %749 = vmatprep.subr.mxu0 0.0
    %750 = vmatpush1.msra.mxu0 0.0
    %751 = vmatprep.subr.mxu0 0.0
    %752 = vmatpush1.msra.mxu0 0.0
    %753 = vmatprep.subr.mxu0 0.0
    %754 = vmatpush1.msra.mxu0 0.0
    %755 = vmatprep.subr.mxu0 0.0
    %756 = vmatpush1.msra.mxu0 0.0
    %757 = vmatprep.subr.mxu0 0.0
    %758 = vmatpush1.msra.mxu0 0.0
    %759 = vmatprep.subr.mxu0 0.0
    %760 = vmatpush1.msra.mxu0 %v738
    %761 = vmatprep.subr.mxu0 0.0
    %762 = vmatpush1.msra.mxu0 %v737
    %763 = vmatprep.subr.mxu0 0.0
    %764 = vmatpush1.msra.mxu0 %v736
    %765 = vmatprep.subr.mxu0 0.0
    %766 = vmatpush1.msra.mxu0 %v735
    %767 = vmatprep.subr.mxu0 0.0
    %768 = vmatpush1.msra.mxu0 %v734
    %769 = vmatprep.subr.mxu0 0.0
    %770 = vmatpush1.msra.mxu0 %v733
    %771 = vmatprep.subr.mxu0 0.0
    %772 = vmatpush1.msra.mxu0 %v732
    %773 = vmatprep.subr.mxu0 0.0
    %774 = vmatpush1.msra.mxu0 %v731
    %775 = vmatprep.subr.mxu0 0.0
    %776 = vmatpush2.msra.mxu0 0.0
    %777 = vmatprep.subr.mxu0 0.0
    %778 = vmatpush2.msra.mxu0 0.0
    %779 = vmatprep.subr.mxu0 0.0
    %780 = vmatpush2.msra.mxu0 0.0
    %781 = vmatprep.subr.mxu0 0.0
    %782 = vmatpush2.msra.mxu0 0.0
    %783 = vmatprep.subr.mxu0 0.0
    %784 = vmatpush2.msra.mxu0 0.0
    %785 = vmatprep.subr.mxu0 0.0
    %786 = vmatpush2.msra.mxu0 0.0
    %787 = vmatprep.subr.mxu0 0.0
    %788 = vmatpush2.msra.mxu0 0.0
    %789 = vmatprep.subr.mxu0 0.0
    %790 = vmatpush2.msra.mxu0 0.0
    %791 = vmatprep.subr.mxu0 0.0
    %792 = vmatpush2.msra.mxu0 0.0
    %793 = vmatprep.subr.mxu0 0.0
    %794 = vmatpush2.msra.mxu0 0.0
    %795 = vmatprep.subr.mxu0 0.0
    %796 = vmatpush2.msra.mxu0 0.0
    %797 = vmatprep.subr.mxu0 0.0
    %798 = vmatpush2.msra.mxu0 0.0
    %799 = vmatprep.subr.mxu0 0.0
    %800 = vmatpush2.msra.mxu0 0.0
    %801 = vmatprep.subr.mxu0 0.0
    %802 = vmatpush2.msra.mxu0 0.0
    %803 = vmatprep.subr.mxu0 0.0
    %804 = vmatpush2.msra.mxu0 0.0
    %805 = vmatprep.subr.mxu0 0.0
    %806 = vmatpush2.msra.mxu0 0.0
    %807 = vmatprep.mubr.f32.mxu0 0.0
    %808 = vmatmul.mubr.f32.gmra.mxu0 %v741
    %v809 = vpop.f32.mrf.mxu0
    %v810 = vadd.f32 0.0, %v809
    %v811 = vpop.f32.mrf.mxu0
    %812 = vdwg.mxu0
    %v813 = vld [vmem:[%s8] sm:$0xff]
    %v814 = vld [vmem:[%s8 + $0x8] sm:$0xff]
    %v815 = vld [vmem:[%s8 + $0x10] sm:$0xff]
    %v816 = vld [vmem:[%s8 + $0x18] sm:$0xff]
    %v817 = vld [vmem:[%s8 + $0x20] sm:$0xff]
    %v818 = vld [vmem:[%s8 + $0x28] sm:$0xff]
    %v819 = vld [vmem:[%s8 + $0x30] sm:$0xff]
    %v820 = vld [vmem:[%s8 + $0x38] sm:$0xff]
    %v821 = vld [vmem:[%s8 + $0x40] sm:$0xff]
    %v822 = vld [vmem:[%s8 + $0x48] sm:$0xff]
    %v823 = vld [vmem:[%s8 + $0x50] sm:$0xff]
    %v824 = vld [vmem:[%s8 + $0x58] sm:$0xff]
    %v825 = vld [vmem:[%s8 + $0x60] sm:$0xff]
    %v826 = vld [vmem:[%s8 + $0x68] sm:$0xff]
    %vm827 = vcmask 916480
    %v829 = vsel %vm827, %v810, 0
    %831 = vmatprep.subr.mxu0 0.0
    %832 = vmatpush1.msra.mxu0 0.0
    %833 = vmatprep.subr.mxu0 0.0
    %834 = vmatpush1.msra.mxu0 0.0
    %835 = vmatprep.subr.mxu0 0.0
    %836 = vmatpush1.msra.mxu0 %v826
    %837 = vmatprep.subr.mxu0 0.0
    %838 = vmatpush1.msra.mxu0 %v825
    %839 = vmatprep.subr.mxu0 0.0
    %840 = vmatpush1.msra.mxu0 %v824
    %841 = vmatprep.subr.mxu0 0.0
    %842 = vmatpush1.msra.mxu0 %v823
    %843 = vmatprep.subr.mxu0 0.0
    %844 = vmatpush1.msra.mxu0 %v822
    %845 = vmatprep.subr.mxu0 0.0
    %846 = vmatpush1.msra.mxu0 %v821
    %847 = vmatprep.subr.mxu0 0.0
    %848 = vmatpush1.msra.mxu0 %v820
    %849 = vmatprep.subr.mxu0 0.0
    %850 = vmatpush1.msra.mxu0 %v819
    %851 = vmatprep.subr.mxu0 0.0
    %852 = vmatpush1.msra.mxu0 %v818
    %853 = vmatprep.subr.mxu0 0.0
    %854 = vmatpush1.msra.mxu0 %v817
    %855 = vmatprep.subr.mxu0 0.0
    %856 = vmatpush1.msra.mxu0 %v816
    %857 = vmatprep.subr.mxu0 0.0
    %858 = vmatpush1.msra.mxu0 %v815
    %859 = vmatprep.subr.mxu0 0.0
    %860 = vmatpush1.msra.mxu0 %v814
    %861 = vmatprep.subr.mxu0 0.0
    %862 = vmatpush1.msra.mxu0 %v813
    %863 = vmatprep.subr.mxu0 0.0
    %864 = vmatpush2.msra.mxu0 0.0
    %865 = vmatprep.subr.mxu0 0.0
    %866 = vmatpush2.msra.mxu0 0.0
    %867 = vmatprep.subr.mxu0 0.0
    %868 = vmatpush2.msra.mxu0 0.0
    %869 = vmatprep.subr.mxu0 0.0
    %870 = vmatpush2.msra.mxu0 0.0
    %871 = vmatprep.subr.mxu0 0.0
    %872 = vmatpush2.msra.mxu0 0.0
    %873 = vmatprep.subr.mxu0 0.0
    %874 = vmatpush2.msra.mxu0 0.0
    %875 = vmatprep.subr.mxu0 0.0
    %876 = vmatpush2.msra.mxu0 0.0
    %877 = vmatprep.subr.mxu0 0.0
    %878 = vmatpush2.msra.mxu0 0.0
    %879 = vmatprep.subr.mxu0 0.0
    %880 = vmatpush2.msra.mxu0 0.0
    %881 = vmatprep.subr.mxu0 0.0
    %882 = vmatpush2.msra.mxu0 0.0
    %883 = vmatprep.subr.mxu0 0.0
    %884 = vmatpush2.msra.mxu0 0.0
    %885 = vmatprep.subr.mxu0 0.0
    %886 = vmatpush2.msra.mxu0 0.0
    %887 = vmatprep.subr.mxu0 0.0
    %888 = vmatpush2.msra.mxu0 0.0
    %889 = vmatprep.subr.mxu0 0.0
    %890 = vmatpush2.msra.mxu0 0.0
    %891 = vmatprep.subr.mxu0 0.0
    %892 = vmatpush2.msra.mxu0 0.0
    %893 = vmatprep.subr.mxu0 0.0
    %894 = vmatpush2.msra.mxu0 0.0
    %895 = vmatprep.mubr.f32.mxu0 0.0
    %896 = vmatmul.mubr.f32.gmra.mxu0 %v829
    %v897 = vpop.f32.mrf.mxu0
    %v898 = vadd.f32 0.0, %v897
    %v899 = vpop.f32.mrf.mxu0
    %900 = vdwg.mxu0
    %vm901 = vcmask 50176
    %902 = vst.msk [vmem:[#allocation2] sm:$0x3] %vm901, %v898
    // Predicated region
    $region38: #{network_forward.1} parent=1 // pred_check
      _
    $region39: #{network_forward.1} parent=1 // pred_check_branch
      %904 = sbr.rel (0) target = $region41
    $region40: #{network_forward.1} parent=1 // pred_region
      %s906 = ssub.s32 32, 32
      %907 = vsyncadd [#allocation3], %s906
      %s909 = sshll.u32 [#allocation2], 4
      %s910 = int_to_ptr.vmem [resolvable:$true] %s909
      %912 = dma.vmem_to_hbm [thread:$0]  %s910, 32, %s9, [#allocation3]
    $region41: #{network_forward.1} parent=1 // pred_fallthru
      _
    // Predicated region
    $region42: #{network_forward.1} parent=1 // pred_check
      _
    $region43: #{network_forward.1} parent=1 // pred_check_branch
      %914 = sbr.rel (0) target = $region45
    $region44: #{network_forward.1} parent=1 // pred_region
      %915 = dma.done [#allocation3], 32
    $region45: #{network_forward.1} parent=1 // pred_fallthru
      _
    %916 = vsyncpa [#allocation3], 1

</llo_original>
